<compile_context>
chip_gen: v7x
topology: tpu7x:2x2x1
jax: 0.10.0
libtpu: 0.0.40
codegen_flags: <defaults>
</compile_context>

<pallas_src>
import jax
import jax.numpy as jnp
from jax.experimental import pallas as pl
from jax.experimental.pallas import tpu as pltpu


def _tpool_kernel(w_ref, x_ref, o_ref):
    # w_ref: (n_f, cin)         -- resident (constant index map)
    # x_ref: (TB, cin, TILE_P)  -- pixels lane-dense
    # o_ref: (TB, n_f, TILE_P)  -- pixels lane-dense
    w = w_ref[...]
    tb = x_ref.shape[0]  # small static constant
    for b in range(tb):
        o_ref[b] = jnp.dot(
            w, x_ref[b], preferred_element_type=jnp.float32
        ).astype(o_ref.dtype)


def tpool_forward(
    x,
    weight,
    stride,
    *,
    target_step_bytes=4 << 20,     # aim for >= ~4 MiB of HBM traffic per grid step
    vmem_block_budget=12 << 20,    # double-buffered block footprint cap (all gens)
    max_batch_tile=16,             # keep the static per-row dot unroll small
):
    """TPool forward.

    Args:
      x:      (N, C, H, W) array (NCHW), N divisible by `stride`.
      weight: (n_f, n_f*stride, 1, 1) Conv2d weight (PyTorch layout), n_f == C.
      stride: temporal pooling stride.

    Returns:
      (N // stride, n_f, H, W) array with x's dtype.
    """
    N, C, H, W = x.shape
    n_f, cin = weight.shape[0], weight.shape[1]
    assert cin == stride * C, "weight in-channels must equal stride * C"
    assert N % stride == 0, "leading dim must be divisible by stride"
    B = N // stride
    P = H * W
    itemsize = jnp.dtype(x.dtype).itemsize

    # NCHW-native views: pure reshapes / tiny weight cast, no data-movement passes.
    xf = x.reshape(B, cin, P)                      # (B, Cin, pixels)
    wm = weight[:, :, 0, 0].astype(x.dtype)        # (n_f, Cin), MXU-native dtype

    # --- Tile selection -----------------------------------------------------
    per_pixel_bytes = (cin + n_f) * itemsize       # in + out bytes per pixel column
    # Largest pixel tile that fits the double-buffered block budget at TB=1.
    tile_p_cap = max(128, ((vmem_block_budget // (2 * per_pixel_bytes)) // 128) * 128)

    if P <= tile_p_cap:
        # Full pixel extent per block: no padding, one contiguous slab per batch
        # element, and contiguous across TB batch elements.
        tile_p = P
        per_batch_bytes = max(1, P * cin * itemsize)
        tb = max(1, min(B, max_batch_tile, pl.cdiv(target_step_bytes, per_batch_bytes)))
        while tb > 1 and 2 * tb * tile_p * per_pixel_bytes > vmem_block_budget:
            tb -= 1
    else:
        # Huge spatial extent: budget-sized 128-multiple tile; the ragged tail
        # block (if any) is handled by Pallas boundary clamping, not wrapper pads.
        tile_p = tile_p_cap
        tb = 1

    grid = (pl.cdiv(B, tb), pl.cdiv(P, tile_p))

    # Explicit VMEM limit with headroom; conservative for v5e (16 MiB default
    # scoped) and safely under v7x's 64 MiB physical VMEM.
    block_footprint = 2 * tb * tile_p * per_pixel_bytes + wm.size * itemsize
    vmem_limit = int(min(48 << 20, max(16 << 20, 2 * block_footprint)))

    cost = pl.CostEstimate(
        flops=2 * B * P * cin * n_f,
        transcendentals=0,
        bytes_accessed=(B * cin * P + B * n_f * P) * itemsize + wm.size * itemsize,
    )

    out = pl.pallas_call(
        _tpool_kernel,
        out_shape=jax.ShapeDtypeStruct((B, n_f, P), x.dtype),
        grid_spec=pltpu.PrefetchScalarGridSpec(
            num_scalar_prefetch=0,
            grid=grid,
            in_specs=[
                pl.BlockSpec((n_f, cin), lambda b, p: (0, 0)),            # weight (resident)
                pl.BlockSpec((tb, cin, tile_p), lambda b, p: (b, 0, p)),  # x slab
            ],
            out_specs=pl.BlockSpec((tb, n_f, tile_p), lambda b, p: (b, 0, p)),
        ),
        compiler_params=pltpu.CompilerParams(
            dimension_semantics=("parallel", "parallel"),
            vmem_limit_bytes=vmem_limit,
        ),
        cost_estimate=cost,
    )(wm, xf)

    return out.reshape(B, n_f, H, W)


def tpool_reference(x, weight, stride):
    """Plain-JAX reference (1x1 conv == einsum over channels)."""
    N, C, H, W = x.shape
    B = N // stride
    xg = x.reshape(B, stride * C, H, W)
    w = weight[:, :, 0, 0]  # (n_f, cin)
    return jnp.einsum("oc,bchw->bohw", w, xg)


if __name__ == "__main__":
    key = jax.random.PRNGKey(0)
    k_x, k_w = jax.random.split(key)

    # Small shapes consistent with the module: n_f=4 channels, stride=2,
    # 2 pooled groups -> input N = 2*stride = 4, spatial 16x16.
    n_f, stride = 4, 2
    B, H, W = 2, 16, 16
    N, C = B * stride, n_f

    x = jax.random.normal(k_x, (N, C, H, W), dtype=jnp.float32)
    # Conv2d(n_f*stride, n_f, 1, bias=False) weight: (n_f, n_f*stride, 1, 1)
    weight = (
        jax.random.normal(k_w, (n_f, n_f * stride, 1, 1), dtype=jnp.float32) * 0.1
    )

    out = tpool_forward(x, weight, stride)
    out = jax.block_until_ready(out)

    ref = tpool_reference(x, weight, stride)
    assert out.shape == (B, n_f, H, W), out.shape
    assert jnp.allclose(out, ref.astype(out.dtype), atol=1e-5, rtol=1e-5), (
        float(jnp.max(jnp.abs(out - ref.astype(out.dtype))))
    )
    print("KERNEL_OK")
</pallas_src>

<mosaic_0001>
module attributes {stable_mosaic.version = 11 : i64} {
  func.func @_tpool_kernel(%arg0: i32, %arg1: i32, %arg2: memref<4x8xf32, #tpu.memory_space<vmem>>, %arg3: memref<2x8x256xf32, #tpu.memory_space<vmem>>, %arg4: memref<2x4x256xf32, #tpu.memory_space<vmem>>) attributes {dimension_semantics = [#tpu.dimension_semantics<parallel>, #tpu.dimension_semantics<parallel>], iteration_bounds = array<i64: 1, 1>, scalar_prefetch = 0 : i64, scratch_operands = 0 : i64, tpu.core_type = #tpu.core_type<tc>, window_params = [{pipeline_mode = #tpu.pipeline_mode<synchronous>, transform_indices = @transform_0, window_bounds = array<i64: 4, 8>}, {transform_indices = @transform_1, window_bounds = array<i64: 2, 8, 256>}, {transform_indices = @transform_2, window_bounds = array<i64: 2, 4, 256>}]} {
    %c0 = arith.constant 0 : index
    %c0_0 = arith.constant 0 : index
    %0 = vector.load %arg2[%c0, %c0_0] : memref<4x8xf32, #tpu.memory_space<vmem>>, vector<4x8xf32>
    %c0_1 = arith.constant 0 : index
    %c0_2 = arith.constant 0 : index
    %c0_3 = arith.constant 0 : index
    %1 = vector.load %arg3[%c0_1, %c0_2, %c0_3] : memref<2x8x256xf32, #tpu.memory_space<vmem>>, vector<1x8x256xf32>
    %2 = vector.shape_cast %1 : vector<1x8x256xf32> to vector<8x256xf32>
    %cst = arith.constant dense<0.000000e+00> : vector<4x256xf32>
    %3 = tpu.matmul %0, %2, %cst {dimension_numbers = #tpu.dot_dimension_numbers<[1], [0], [0], [1], [0, 0, 1, 1], [], []>} : vector<4x8xf32>, vector<8x256xf32>, vector<4x256xf32> -> vector<4x256xf32>
    %c0_4 = arith.constant 0 : index
    %c0_5 = arith.constant 0 : index
    %c0_6 = arith.constant 0 : index
    %4 = vector.load %arg4[%c0_4, %c0_5, %c0_6] : memref<2x4x256xf32, #tpu.memory_space<vmem>>, vector<1x4x256xf32>
    %5 = vector.shape_cast %4 : vector<1x4x256xf32> to vector<4x256xf32>
    %6 = vector.shape_cast %3 : vector<4x256xf32> to vector<1x4x256xf32>
    tpu.vector_store %arg4[%c0_4, %c0_5, %c0_6], %6 {strides = array<i32>} : memref<2x4x256xf32, #tpu.memory_space<vmem>>, vector<1x4x256xf32>,
    %c1 = arith.constant 1 : index
    %c0_7 = arith.constant 0 : index
    %c0_8 = arith.constant 0 : index
    %7 = vector.load %arg3[%c1, %c0_7, %c0_8] : memref<2x8x256xf32, #tpu.memory_space<vmem>>, vector<1x8x256xf32>
    %8 = vector.shape_cast %7 : vector<1x8x256xf32> to vector<8x256xf32>
    %cst_9 = arith.constant dense<0.000000e+00> : vector<4x256xf32>
    %9 = tpu.matmul %0, %8, %cst_9 {dimension_numbers = #tpu.dot_dimension_numbers<[1], [0], [0], [1], [0, 0, 1, 1], [], []>} : vector<4x8xf32>, vector<8x256xf32>, vector<4x256xf32> -> vector<4x256xf32>
    %c1_10 = arith.constant 1 : index
    %c0_11 = arith.constant 0 : index
    %c0_12 = arith.constant 0 : index
    %10 = vector.load %arg4[%c1_10, %c0_11, %c0_12] : memref<2x4x256xf32, #tpu.memory_space<vmem>>, vector<1x4x256xf32>
    %11 = vector.shape_cast %10 : vector<1x4x256xf32> to vector<4x256xf32>
    %12 = vector.shape_cast %9 : vector<4x256xf32> to vector<1x4x256xf32>
    tpu.vector_store %arg4[%c1_10, %c0_11, %c0_12], %12 {strides = array<i32>} : memref<2x4x256xf32, #tpu.memory_space<vmem>>, vector<1x4x256xf32>,
    return
  }
  func.func @transform_0(%arg0: i32, %arg1: i32) -> (i32, i32) {
    %c0_i32 = arith.constant 0 : i32
    %c0_i32_0 = arith.constant 0 : i32
    %c0_i32_1 = arith.constant 0 : i32
    return %c0_i32, %c0_i32_0 : i32, i32
  }
  func.func @transform_1(%arg0: i32, %arg1: i32) -> (i32, i32, i32) {
    %c0_i32 = arith.constant 0 : i32
    %c0_i32_0 = arith.constant 0 : i32
    return %arg0, %c0_i32, %arg1 : i32, i32, i32
  }
  func.func @transform_2(%arg0: i32, %arg1: i32) -> (i32, i32, i32) {
    %c0_i32 = arith.constant 0 : i32
    %c0_i32_0 = arith.constant 0 : i32
    return %arg0, %c0_i32, %arg1 : i32, i32, i32
  }
}

</mosaic_0001>

<llo_original>
// kernel: tpu_custom_call.1
$region0: #{tpu_custom_call.1}
  #allocation0 [shape = 'u32[]', space=smem, size = 0x4, offset = 0x4, fixed_abs, tag = 'smem constant byte address 0x4 - core index']
  #allocation1 [shape = 'u32[144,128]{1,0:T(1,128)}', space=vmem, size = 0x12000, scoped, tag = 'internal scratch']
  %s0 = inlined_call_operand.hbm [shape: f32[4,8], index: 0, kind: input, shape index: {}]
  %s1 = inlined_call_operand.hbm [shape: f32[2,8,256], index: 1, kind: input, shape index: {}]
  %s2 = inlined_call_operand.hbm [shape: f32[2,4,256], index: 2, kind: output, shape index: {}]
  %s3 = sld [smem:[#allocation0]]
  $region26: #{tpu_custom_call.1} parent=0
    _
  %s5 = ssub.s32 1, %s3
  %s6 = scalar_select 0, %s5, %s3
  $region1: #{tpu_custom_call.1} parent=0
    #allocation2 [shape = 'u8[2048]{0}', space=vmem, size = 0x800, scoped, tag = 'input window, operand 0, single buffered']
    #allocation3 [shape = 's32[1]{0}', space=sflag, size = 0x4, scoped, tag = 'scoped memory for tpu_custom_call.1']
    #allocation4 [shape = 's32[1]{0}', space=sflag, size = 0x4, scoped, tag = 'scoped memory for tpu_custom_call.1']
    #allocation5 [shape = 'u8[16384]{0}', space=vmem, size = 0x4000, scoped, tag = 'input window, operand 1, single buffered']
    #allocation6 [shape = 's32[1]{0}', space=sflag, size = 0x4, scoped, tag = 'scoped memory for tpu_custom_call.1']
    #allocation7 [shape = 'u8[8192]{0}', space=vmem, size = 0x2000, scoped, tag = 'output window, operand 0, single buffered']
    %7 = vsyncpa [#allocation3], 0
    %8 = vsyncpa [#allocation6], 0
    %9 = vsyncpa [#allocation4], 0
    // Predicated region
    $region2: #{tpu_custom_call.1} parent=1 // pred_check
      _
    $region3: #{tpu_custom_call.1} parent=1 // pred_check_branch
      %11 = sbr.rel (0) target = $region5
    $region4: #{tpu_custom_call.1} parent=1 // pred_region
      %s13 = ssub.s32 64, 64
      %14 = vsyncadd [#allocation3], %s13
      %s16 = sshll.u32 [#allocation2], 4
      %s17 = int_to_ptr.vmem [resolvable:$true] %s16
      %19 = dma.hbm_to_vmem [thread:$0]  %s0, 64, %s17, [#allocation3]
    $region5: #{tpu_custom_call.1} parent=1 // pred_fallthru
      _
    // Predicated region
    $region6: #{tpu_custom_call.1} parent=1 // pred_check
      _
    $region7: #{tpu_custom_call.1} parent=1 // pred_check_branch
      %21 = sbr.rel (0) target = $region9
    $region8: #{tpu_custom_call.1} parent=1 // pred_region
      %s23 = ssub.s32 512, 512
      %24 = vsyncadd [#allocation6], %s23
      %s25 = sshll.u32 [#allocation5], 4
      %s26 = int_to_ptr.vmem [resolvable:$true] %s25
      %31 = dma.hbm_to_vmem [thread:$0]  %s1, 512, %s26, [#allocation6], 256, 256, 16
    $region9: #{tpu_custom_call.1} parent=1 // pred_fallthru
      _
    // Predicated region
    $region10: #{tpu_custom_call.1} parent=1 // pred_check
      _
    $region11: #{tpu_custom_call.1} parent=1 // pred_check_branch
      %33 = sbr.rel (0) target = $region13
    $region12: #{tpu_custom_call.1} parent=1 // pred_region
      %34 = dma.done [#allocation3], 64
    $region13: #{tpu_custom_call.1} parent=1 // pred_fallthru
      _
    // Predicated region
    $region14: #{tpu_custom_call.1} parent=1 // pred_check
      _
    $region15: #{tpu_custom_call.1} parent=1 // pred_check_branch
      %36 = sbr.rel (0) target = $region17
    $region16: #{tpu_custom_call.1} parent=1 // pred_region
      %37 = dma.done [#allocation6], 512
    $region17: #{tpu_custom_call.1} parent=1 // pred_fallthru
      _
    %v38 = vld [vmem:[#allocation2] sm:$0xf]
    %v39 = vld [vmem:[#allocation5] sm:$0xff]
    %v40 = vld [vmem:[#allocation5 + $0x8] sm:$0xff]
    %vm41 = vcmask 64512
    %v43 = vsel %vm41, %v38, 0
    %45 = vmatprep.subr.mxu0 %v40
    %46 = vmatpush1.msra.mxu0 %v39
    %47 = vmatprep.subr.mxu0 0.0
    %48 = vmatpush1.msra.mxu0 0.0
    %49 = vmatprep.subr.mxu0 0.0
    %50 = vmatpush1.msra.mxu0 0.0
    %51 = vmatprep.subr.mxu0 0.0
    %52 = vmatpush1.msra.mxu0 0.0
    %53 = vmatprep.subr.mxu0 0.0
    %54 = vmatpush1.msra.mxu0 0.0
    %55 = vmatprep.subr.mxu0 0.0
    %56 = vmatpush1.msra.mxu0 0.0
    %57 = vmatprep.subr.mxu0 0.0
    %58 = vmatpush1.msra.mxu0 0.0
    %59 = vmatprep.subr.mxu0 0.0
    %60 = vmatpush1.msra.mxu0 0.0
    %61 = vmatprep.subr.mxu0 0.0
    %62 = vmatpush1.msra.mxu0 0.0
    %63 = vmatprep.subr.mxu0 0.0
    %64 = vmatpush1.msra.mxu0 0.0
    %65 = vmatprep.subr.mxu0 0.0
    %66 = vmatpush1.msra.mxu0 0.0
    %67 = vmatprep.subr.mxu0 0.0
    %68 = vmatpush1.msra.mxu0 0.0
    %69 = vmatprep.subr.mxu0 0.0
    %70 = vmatpush1.msra.mxu0 0.0
    %71 = vmatprep.subr.mxu0 0.0
    %72 = vmatpush1.msra.mxu0 0.0
    %73 = vmatprep.subr.mxu0 0.0
    %74 = vmatpush1.msra.mxu0 0.0
    %75 = vmatprep.subr.mxu0 0.0
    %76 = vmatpush1.msra.mxu0 0.0
    %77 = vmatprep.subr.mxu0 0.0
    %78 = vmatpush1.msra.mxu0 0.0
    %79 = vmatprep.subr.mxu0 0.0
    %80 = vmatpush1.msra.mxu0 0.0
    %81 = vmatprep.subr.mxu0 0.0
    %82 = vmatpush1.msra.mxu0 0.0
    %83 = vmatprep.subr.mxu0 0.0
    %84 = vmatpush1.msra.mxu0 0.0
    %85 = vmatprep.subr.mxu0 0.0
    %86 = vmatpush1.msra.mxu0 0.0
    %87 = vmatprep.subr.mxu0 0.0
    %88 = vmatpush1.msra.mxu0 0.0
    %89 = vmatprep.subr.mxu0 0.0
    %90 = vmatpush1.msra.mxu0 0.0
    %91 = vmatprep.subr.mxu0 0.0
    %92 = vmatpush1.msra.mxu0 0.0
    %93 = vmatprep.subr.mxu0 0.0
    %94 = vmatpush1.msra.mxu0 0.0
    %95 = vmatprep.subr.mxu0 0.0
    %96 = vmatpush1.msra.mxu0 0.0
    %97 = vmatprep.subr.mxu0 0.0
    %98 = vmatpush1.msra.mxu0 0.0
    %99 = vmatprep.subr.mxu0 0.0
    %100 = vmatpush1.msra.mxu0 0.0
    %101 = vmatprep.subr.mxu0 0.0
    %102 = vmatpush1.msra.mxu0 0.0
    %103 = vmatprep.subr.mxu0 0.0
    %104 = vmatpush1.msra.mxu0 0.0
    %105 = vmatprep.subr.mxu0 0.0
    %106 = vmatpush1.msra.mxu0 0.0
    %107 = vmatprep.subr.mxu0 0.0
    %108 = vmatpush1.msra.mxu0 0.0
    %109 = vmatprep.mubr.f32.mxu0 0.0
    %110 = vmatmul.mubr.f32.gmra.mrb[0].mxu0 %v43
    %v111 = vpop.f32.mrb[0].mxu0
    %v112 = vadd.f32 0.0, %v111
    %v113 = vpop.f32.mrb[0].mxu0
    %v114 = vadd.f32 0.0, %v113
    %115 = vdwg.mxu0
    %v118 = vcombine.low %v112, %v114
    %120 = vst [vmem:[#allocation7] sm:$0xff] %v118
    %s121 = scalar_lea.vmem [#allocation5], 16
    %v122 = vld [vmem:[%s121] sm:$0xff]
    %v123 = vld [vmem:[%s121 + $0x8] sm:$0xff]
    %124 = vmatprep.subr.mxu0 %v123
    %125 = vmatpush1.msra.mxu0 %v122
    %126 = vmatprep.subr.mxu0 0.0
    %127 = vmatpush1.msra.mxu0 0.0
    %128 = vmatprep.subr.mxu0 0.0
    %129 = vmatpush1.msra.mxu0 0.0
    %130 = vmatprep.subr.mxu0 0.0
    %131 = vmatpush1.msra.mxu0 0.0
    %132 = vmatprep.subr.mxu0 0.0
    %133 = vmatpush1.msra.mxu0 0.0
    %134 = vmatprep.subr.mxu0 0.0
    %135 = vmatpush1.msra.mxu0 0.0
    %136 = vmatprep.subr.mxu0 0.0
    %137 = vmatpush1.msra.mxu0 0.0
    %138 = vmatprep.subr.mxu0 0.0
    %139 = vmatpush1.msra.mxu0 0.0
    %140 = vmatprep.subr.mxu0 0.0
    %141 = vmatpush1.msra.mxu0 0.0
    %142 = vmatprep.subr.mxu0 0.0
    %143 = vmatpush1.msra.mxu0 0.0
    %144 = vmatprep.subr.mxu0 0.0
    %145 = vmatpush1.msra.mxu0 0.0
    %146 = vmatprep.subr.mxu0 0.0
    %147 = vmatpush1.msra.mxu0 0.0
    %148 = vmatprep.subr.mxu0 0.0
    %149 = vmatpush1.msra.mxu0 0.0
    %150 = vmatprep.subr.mxu0 0.0
    %151 = vmatpush1.msra.mxu0 0.0
    %152 = vmatprep.subr.mxu0 0.0
    %153 = vmatpush1.msra.mxu0 0.0
    %154 = vmatprep.subr.mxu0 0.0
    %155 = vmatpush1.msra.mxu0 0.0
    %156 = vmatprep.subr.mxu0 0.0
    %157 = vmatpush1.msra.mxu0 0.0
    %158 = vmatprep.subr.mxu0 0.0
    %159 = vmatpush1.msra.mxu0 0.0
    %160 = vmatprep.subr.mxu0 0.0
    %161 = vmatpush1.msra.mxu0 0.0
    %162 = vmatprep.subr.mxu0 0.0
    %163 = vmatpush1.msra.mxu0 0.0
    %164 = vmatprep.subr.mxu0 0.0
    %165 = vmatpush1.msra.mxu0 0.0
    %166 = vmatprep.subr.mxu0 0.0
    %167 = vmatpush1.msra.mxu0 0.0
    %168 = vmatprep.subr.mxu0 0.0
    %169 = vmatpush1.msra.mxu0 0.0
    %170 = vmatprep.subr.mxu0 0.0
    %171 = vmatpush1.msra.mxu0 0.0
    %172 = vmatprep.subr.mxu0 0.0
    %173 = vmatpush1.msra.mxu0 0.0
    %174 = vmatprep.subr.mxu0 0.0
    %175 = vmatpush1.msra.mxu0 0.0
    %176 = vmatprep.subr.mxu0 0.0
    %177 = vmatpush1.msra.mxu0 0.0
    %178 = vmatprep.subr.mxu0 0.0
    %179 = vmatpush1.msra.mxu0 0.0
    %180 = vmatprep.subr.mxu0 0.0
    %181 = vmatpush1.msra.mxu0 0.0
    %182 = vmatprep.subr.mxu0 0.0
    %183 = vmatpush1.msra.mxu0 0.0
    %184 = vmatprep.subr.mxu0 0.0
    %185 = vmatpush1.msra.mxu0 0.0
    %186 = vmatprep.subr.mxu0 0.0
    %187 = vmatpush1.msra.mxu0 0.0
    %188 = vmatprep.mubr.f32.mxu0 0.0
    %189 = vmatmul.mubr.f32.gmra.mrb[0].mxu0 %v43
    %v190 = vpop.f32.mrb[0].mxu0
    %v191 = vadd.f32 0.0, %v190
    %v192 = vpop.f32.mrb[0].mxu0
    %v193 = vadd.f32 0.0, %v192
    %194 = vdwg.mxu0
    %v197 = vcombine.low %v191, %v193
    %s199 = scalar_lea.vmem [#allocation7], 8
    %200 = vst [vmem:[%s199] sm:$0xff] %v197
    // Predicated region
    $region18: #{tpu_custom_call.1} parent=1 // pred_check
      _
    $region19: #{tpu_custom_call.1} parent=1 // pred_check_branch
      %202 = sbr.rel (0) target = $region21
    $region20: #{tpu_custom_call.1} parent=1 // pred_region
      %s204 = ssub.s32 256, 256
      %205 = vsyncadd [#allocation4], %s204
      %s206 = sshll.u32 [#allocation7], 4
      %s207 = int_to_ptr.vmem [resolvable:$true] %s206
      %212 = dma.vmem_to_hbm [thread:$0]  %s207, 256, %s2, [#allocation4], 128, 128, 8
    $region21: #{tpu_custom_call.1} parent=1 // pred_fallthru
      _
    // Predicated region
    $region22: #{tpu_custom_call.1} parent=1 // pred_check
      _
    $region23: #{tpu_custom_call.1} parent=1 // pred_check_branch
      %214 = sbr.rel (0) target = $region25
    $region24: #{tpu_custom_call.1} parent=1 // pred_region
      %215 = dma.done [#allocation4], 256
    $region25: #{tpu_custom_call.1} parent=1 // pred_fallthru
      _
    %216 = vsyncpa [#allocation3], 1
    %217 = vsyncpa [#allocation6], 1
    %218 = vsyncpa [#allocation4], 1

</llo_original>
